<compile_context>
chip_gen: v7x
topology: tpu7x:2x2x1
jax: 0.10.0
libtpu: 0.0.40
codegen_flags: <defaults>
</compile_context>

<pallas_src>
import jax
import jax.numpy as jnp
from jax import lax
from jax.experimental import pallas as pl
from jax.experimental.pallas import tpu as pltpu


# ---- synthetic ObsSpaceUnit constants (deterministic, in-script) -----------
class ObsSpaceUnit:
    target_factory_pos_start = 4
    target_pos_start = 8

    def __init__(self, in_dim):
        # per-feature positive normalizer, deterministic
        self.normer = jnp.arange(1, in_dim + 1, dtype=jnp.float32) * 0.5 + 1.0


TF = ObsSpaceUnit.target_factory_pos_start
TP = ObsSpaceUnit.target_pos_start
TAU = 8.0  # gumbel_softmax temperature used in the PyTorch forward


# ---- Pallas kernel: the whole forward hot path ------------------------------
def actmlp_kernel(xg_ref, inv_normer_ref, w1a_ref, b1a_ref, wo_ref, bo_ref,
                  out_ref):
    in_dim = inv_normer_ref.shape[1]
    aug = w1a_ref.shape[1]          # in_dim + hidden_dim

    # single packed load [x | gumbel/tau]; all elementwise math in f32
    xg = xg_ref[...].astype(jnp.float32)
    # x = (x / normer).float()  -> multiply by precomputed reciprocal
    x = xg[:, :in_dim] * inv_normer_ref[...]
    g_over_tau = xg[:, in_dim:]     # gumbel / tau, pre-scaled in the wrapper

    # slice normalization of columns {TF,TF+1} and {TP,TP+1}:
    # two per-row approx reciprocals (EUP) + one masked multiply over the tile
    r_tf = pl.reciprocal(jnp.abs(x[:, TF:TF + 1]) + jnp.abs(x[:, TF + 1:TF + 2]) + 1.0,
                         approx=True)
    r_tp = pl.reciprocal(jnp.abs(x[:, TP:TP + 1]) + jnp.abs(x[:, TP + 1:TP + 2]) + 1.0,
                         approx=True)
    col = lax.broadcasted_iota(jnp.int32, (1, in_dim), 1)
    scale = jnp.where((col == TF) | (col == TF + 1), r_tf,
                      jnp.where((col == TP) | (col == TP + 1), r_tp, 1.0))
    x = x * scale

    # fused first matmul (bf16 MXU, f32 acc): z = [x | x@W1 + b1]
    z = jnp.dot(x.astype(jnp.bfloat16), w1a_ref[...],
                preferred_element_type=jnp.float32) + b1a_ref[...]
    col_aug = lax.broadcasted_iota(jnp.int32, (1, aug), 1)
    h = jnp.where(col_aug < in_dim, z, jnp.tanh(z))     # [x | tanh(x@W1+b1)]

    # fused output matmul (1/tau already folded into wo/bo) + gumbel/tau
    y = (jnp.dot(h.astype(jnp.bfloat16), wo_ref[...],
                 preferred_element_type=jnp.float32)
         + bo_ref[...] + g_over_tau)

    # numerically-stable softmax; exact reciprocal so rows sum to 1 (1e-5 check)
    m = jnp.max(y, axis=-1, keepdims=True)
    e = jnp.exp(y - m)
    out_ref[...] = e * pl.reciprocal(jnp.sum(e, axis=-1, keepdims=True))
    # TODO(synk): lane-dense (tile_b,16)->(tile_b*16//128,128) output repack skipped;
    # the sublane->lane reshape is not guaranteed to lower in Mosaic (64 B/row store).


# ---- tile / VMEM sizing helpers ---------------------------------------------
def _vmem_capacity_bytes(default=64 << 20):
    try:
        info = pltpu.get_tpu_info()
        cap = getattr(info, "vmem_capacity_bytes", None)
        return int(cap) if cap else default
    except Exception:
        return default


def _pick_batch_tile(B, bytes_per_row, vmem_budget, cap=4096, granule=16):
    """Largest batch tile that fits the VMEM budget, <= cap, and leaves the grid
    with >= 2 steps when B allows (so v7x can shard the axis across both TCs)."""
    tb = min(cap, max(granule, vmem_budget // max(bytes_per_row, 1)))
    if B > granule:
        half = -(-B // 2)                       # ceil(B/2)
        half = -(-half // granule) * granule    # round up to granule
        tb = min(tb, half)
    tb = max(granule, (tb // granule) * granule)
    return tb


# ---- wrapper ----------------------------------------------------------------
def act_mlp_forward(x, normer, ws, bs, w1, b1, w2, b2, gumbel, *, tile_b=None):
    B, in_dim = x.shape
    hidden_dim = w1.shape[1]
    out_dim = ws.shape[1]
    aug = in_dim + hidden_dim
    packed_dim = in_dim + out_dim

    # ---- one-time parameter prep (fusion + reciprocal/tau folding) ----------
    inv_normer = (1.0 / normer.astype(jnp.float32)).reshape(1, in_dim)
    w1_aug = jnp.concatenate([jnp.eye(in_dim, dtype=jnp.float32),
                              w1.astype(jnp.float32)],
                             axis=1).astype(jnp.bfloat16)          # (in, in+hid)
    b1_aug = jnp.concatenate([jnp.zeros((1, in_dim), jnp.float32),
                              b1.astype(jnp.float32)], axis=1)     # (1, in+hid)
    w_out = (jnp.concatenate([ws, w2], axis=0).astype(jnp.float32)
             * (1.0 / TAU)).astype(jnp.bfloat16)                   # (in+hid, out)
    b_out = (bs + b2).astype(jnp.float32) * (1.0 / TAU)            # (1, out)

    # pack [x | gumbel/tau] into one bf16 stream (single wide DMA per step)
    xg = jnp.concatenate([x.astype(jnp.float32),
                          gumbel.astype(jnp.float32) * (1.0 / TAU)],
                         axis=1).astype(jnp.bfloat16)              # (B, in+out)

    # ---- VMEM-aware tile selection + batch padding ---------------------------
    vmem_cap = _vmem_capacity_bytes()                 # 128 MiB v5e/v6e, 64 MiB v7x
    vmem_limit = min(64 << 20, vmem_cap // 2)         # explicit scoped VMEM limit
    # double-buffered streamed blocks, lanes padded to 128: bf16 in + f32 out
    stream_bytes_per_row = 2 * (128 * 2) + 2 * (128 * 4)
    if tile_b is None:
        tile_b = _pick_batch_tile(B, stream_bytes_per_row, vmem_limit // 2)
    n_steps = pl.cdiv(B, tile_b)
    B_pad = n_steps * tile_b
    if B_pad != B:
        xg = jnp.pad(xg, ((0, B_pad - B), (0, 0)))    # zero rows are harmless
    grid = (n_steps,)

    in_specs = [
        pl.BlockSpec((tile_b, packed_dim), lambda i: (i, 0)),   # [x|g/tau] (tiled)
        pl.BlockSpec((1, in_dim), lambda i: (0, 0)),            # 1/normer (resident)
        pl.BlockSpec((in_dim, aug), lambda i: (0, 0)),          # [I | W1]  (resident)
        pl.BlockSpec((1, aug), lambda i: (0, 0)),               # [0 | b1]  (resident)
        pl.BlockSpec((aug, out_dim), lambda i: (0, 0)),         # [Ws;W2]/tau
        pl.BlockSpec((1, out_dim), lambda i: (0, 0)),           # (bs+b2)/tau
    ]
    out_specs = pl.BlockSpec((tile_b, out_dim), lambda i: (i, 0))

    cost = pl.CostEstimate(
        flops=2 * B_pad * (in_dim * aug + aug * out_dim),
        transcendentals=B_pad * (aug + out_dim),                 # tanh + exp
        bytes_accessed=(2 * B_pad * packed_dim + 4 * B_pad * out_dim
                        + 2 * in_dim * aug + 4 * aug
                        + 2 * aug * out_dim + 4 * (in_dim + out_dim)),
    )

    out = pl.pallas_call(
        actmlp_kernel,
        out_shape=jax.ShapeDtypeStruct((B_pad, out_dim), jnp.float32),
        grid=grid,
        in_specs=in_specs,
        out_specs=out_specs,
        compiler_params=pltpu.CompilerParams(
            dimension_semantics=("parallel",),
            vmem_limit_bytes=vmem_limit,
        ),
        cost_estimate=cost,
    )(xg, inv_normer, w1_aug, b1_aug, w_out, b_out)
    return out[:B] if B_pad != B else out


# ---- pure-JAX reference (unfused, matches the PyTorch forward) --------------
def reference(x, normer, ws, bs, w1, b1, w2, b2, gumbel):
    x = x.astype(jnp.float32) / normer
    ntf = jnp.abs(x[:, TF:TF + 1]) + jnp.abs(x[:, TF + 1:TF + 2]) + 1.0
    ntp = jnp.abs(x[:, TP:TP + 1]) + jnp.abs(x[:, TP + 1:TP + 2]) + 1.0
    x = x.at[:, TF:TF + 2].set(x[:, TF:TF + 2] / ntf)
    x = x.at[:, TP:TP + 2].set(x[:, TP:TP + 2] / ntp)
    h = jnp.tanh(x @ w1 + b1)
    logits = (x @ ws + bs) + (h @ w2 + b2)
    return jax.nn.softmax((logits + gumbel) / TAU, axis=-1)


if __name__ == "__main__":
    B, in_dim, hidden_dim, out_dim = 128, 32, 64, 16

    key = jax.random.PRNGKey(0)
    kx, kws, kbs, kw1, kb1, kw2, kb2, kg = jax.random.split(key, 8)

    # deterministic example input / parameters
    x = jax.random.normal(kx, (B, in_dim), jnp.float32) * 3.0
    obs = ObsSpaceUnit(in_dim)
    normer = obs.normer.reshape(1, in_dim)

    # simple_net: Linear(in_dim, out_dim)
    ws = jax.random.normal(kws, (in_dim, out_dim), jnp.float32) * 0.1
    bs = jax.random.normal(kbs, (1, out_dim), jnp.float32) * 0.1
    # deep_net: Linear(in_dim, hidden) -> Tanh -> Linear(hidden, out_dim)
    w1 = jax.random.normal(kw1, (in_dim, hidden_dim), jnp.float32) * 0.1
    b1 = jax.random.normal(kb1, (1, hidden_dim), jnp.float32) * 0.1
    w2 = jax.random.normal(kw2, (hidden_dim, out_dim), jnp.float32) * 0.1
    b2 = jax.random.normal(kb2, (1, out_dim), jnp.float32) * 0.1

    # Gumbel(0,1) noise for gumbel_softmax, sampled deterministically in JAX
    # (sampling itself is glue; it is packed with x into one kernel stream).
    u = jax.random.uniform(kg, (B, out_dim), jnp.float32,
                           minval=1e-6, maxval=1.0 - 1e-6)
    gumbel = -jnp.log(-jnp.log(u))

    # auto tile selection -> tile_b=64, grid=(2,): exercises the batch pipeline
    # and gives v7x's two TensorCores one step each.
    out = act_mlp_forward(x, normer, ws, bs, w1, b1, w2, b2, gumbel)
    out = jax.block_until_ready(out)

    ref = reference(x, normer, ws, bs, w1, b1, w2, b2, gumbel)
    assert out.shape == (B, out_dim)
    # bf16 input/weight streams + fused/augmented MXU matmuls round differently
    # from the unfused f32 reference -> relaxed tolerance.
    assert jnp.allclose(out, ref, atol=2e-3, rtol=2e-3), "mismatch vs reference"
    # rows of a softmax sum to 1 (softmax-denominator reciprocal kept exact)
    assert jnp.allclose(jnp.sum(out, axis=-1), jnp.ones((B,)), atol=1e-5)

    print("KERNEL_OK")
</pallas_src>

<mosaic_0001>
module attributes {stable_mosaic.version = 11 : i64} {
  func.func @actmlp_kernel(%arg0: i32, %arg1: memref<64x48xbf16, #tpu.memory_space<vmem>>, %arg2: memref<1x32xf32, #tpu.memory_space<vmem>>, %arg3: memref<32x96xbf16, #tpu.memory_space<vmem>>, %arg4: memref<1x96xf32, #tpu.memory_space<vmem>>, %arg5: memref<96x16xbf16, #tpu.memory_space<vmem>>, %arg6: memref<1x16xf32, #tpu.memory_space<vmem>>, %arg7: memref<64x16xf32, #tpu.memory_space<vmem>>) attributes {dimension_semantics = [#tpu.dimension_semantics<parallel>], iteration_bounds = array<i64: 2>, scalar_prefetch = 0 : i64, scratch_operands = 0 : i64, tpu.core_type = #tpu.core_type<tc>, window_params = [{transform_indices = @transform_0, window_bounds = array<i64: 64, 48>}, {pipeline_mode = #tpu.pipeline_mode<synchronous>, transform_indices = @transform_1, window_bounds = array<i64: 1, 32>}, {pipeline_mode = #tpu.pipeline_mode<synchronous>, transform_indices = @transform_2, window_bounds = array<i64: 32, 96>}, {pipeline_mode = #tpu.pipeline_mode<synchronous>, transform_indices = @transform_3, window_bounds = array<i64: 1, 96>}, {pipeline_mode = #tpu.pipeline_mode<synchronous>, transform_indices = @transform_4, window_bounds = array<i64: 96, 16>}, {pipeline_mode = #tpu.pipeline_mode<synchronous>, transform_indices = @transform_5, window_bounds = array<i64: 1, 16>}, {transform_indices = @transform_6, window_bounds = array<i64: 64, 16>}]} {
    %c0 = arith.constant 0 : index
    %c0_0 = arith.constant 0 : index
    %0 = vector.load %arg1[%c0, %c0_0] : memref<64x48xbf16, #tpu.memory_space<vmem>>, vector<64x48xbf16>
    %1 = arith.extf %0 : vector<64x48xbf16> to vector<64x48xf32>
    %2 = vector.extract_strided_slice %1 {offsets = [0, 0], sizes = [64, 32], strides = [1, 1]} : vector<64x48xf32> to vector<64x32xf32>
    %c0_1 = arith.constant 0 : index
    %c0_2 = arith.constant 0 : index
    %3 = vector.load %arg2[%c0_1, %c0_2] : memref<1x32xf32, #tpu.memory_space<vmem>>, vector<1x32xf32>
    %4 = vector.broadcast %3 : vector<1x32xf32> to vector<64x32xf32>
    %5 = arith.mulf %2, %4 : vector<64x32xf32>
    %6 = vector.extract_strided_slice %1 {offsets = [0, 32], sizes = [64, 16], strides = [1, 1]} : vector<64x48xf32> to vector<64x16xf32>
    %7 = vector.extract_strided_slice %5 {offsets = [0, 4], sizes = [64, 1], strides = [1, 1]} : vector<64x32xf32> to vector<64x1xf32>
    %8 = math.absf %7 : vector<64x1xf32>
    %9 = vector.extract_strided_slice %5 {offsets = [0, 5], sizes = [64, 1], strides = [1, 1]} : vector<64x32xf32> to vector<64x1xf32>
    %10 = math.absf %9 : vector<64x1xf32>
    %11 = arith.addf %8, %10 : vector<64x1xf32>
    %cst = arith.constant 1.000000e+00 : f32
    %12 = vector.broadcast %cst : f32 to vector<64x1xf32>
    %13 = arith.addf %11, %12 : vector<64x1xf32>
    %14 = tpu.reciprocal %13 {approx = true} : vector<64x1xf32> -> vector<64x1xf32>
    %15 = vector.extract_strided_slice %5 {offsets = [0, 8], sizes = [64, 1], strides = [1, 1]} : vector<64x32xf32> to vector<64x1xf32>
    %16 = math.absf %15 : vector<64x1xf32>
    %17 = vector.extract_strided_slice %5 {offsets = [0, 9], sizes = [64, 1], strides = [1, 1]} : vector<64x32xf32> to vector<64x1xf32>
    %18 = math.absf %17 : vector<64x1xf32>
    %19 = arith.addf %16, %18 : vector<64x1xf32>
    %cst_3 = arith.constant 1.000000e+00 : f32
    %20 = vector.broadcast %cst_3 : f32 to vector<64x1xf32>
    %21 = arith.addf %19, %20 : vector<64x1xf32>
    %22 = tpu.reciprocal %21 {approx = true} : vector<64x1xf32> -> vector<64x1xf32>
    %23 = tpu.iota {dimensions = array<i32: 1>} : vector<1x32xi32>
    %c4_i32 = arith.constant 4 : i32
    %24 = vector.broadcast %c4_i32 : i32 to vector<1x32xi32>
    %25 = arith.cmpi eq, %23, %24 : vector<1x32xi32>
    %c5_i32 = arith.constant 5 : i32
    %26 = vector.broadcast %c5_i32 : i32 to vector<1x32xi32>
    %27 = arith.cmpi eq, %23, %26 : vector<1x32xi32>
    %28 = arith.ori %25, %27 : vector<1x32xi1>
    %c8_i32 = arith.constant 8 : i32
    %29 = vector.broadcast %c8_i32 : i32 to vector<1x32xi32>
    %30 = arith.cmpi eq, %23, %29 : vector<1x32xi32>
    %c9_i32 = arith.constant 9 : i32
    %31 = vector.broadcast %c9_i32 : i32 to vector<1x32xi32>
    %32 = arith.cmpi eq, %23, %31 : vector<1x32xi32>
    %33 = arith.ori %30, %32 : vector<1x32xi1>
    %cst_4 = arith.constant 1.000000e+00 : f32
    %34 = vector.shape_cast %33 : vector<1x32xi1> to vector<1x32xi1>
    %35 = vector.broadcast %34 : vector<1x32xi1> to vector<64x32xi1>
    %36 = vector.shape_cast %22 : vector<64x1xf32> to vector<64x1xf32>
    %37 = vector.broadcast %36 : vector<64x1xf32> to vector<64x32xf32>
    %38 = vector.broadcast %cst_4 : f32 to vector<64x32xf32>
    %39 = arith.select %35, %37, %38 : vector<64x32xi1>, vector<64x32xf32>
    %40 = vector.shape_cast %28 : vector<1x32xi1> to vector<1x32xi1>
    %41 = vector.broadcast %40 : vector<1x32xi1> to vector<64x32xi1>
    %42 = vector.shape_cast %14 : vector<64x1xf32> to vector<64x1xf32>
    %43 = vector.broadcast %42 : vector<64x1xf32> to vector<64x32xf32>
    %44 = arith.select %41, %43, %39 : vector<64x32xi1>, vector<64x32xf32>
    %45 = arith.mulf %5, %44 : vector<64x32xf32>
    %46 = arith.truncf %45 : vector<64x32xf32> to vector<64x32xbf16>
    %c0_5 = arith.constant 0 : index
    %c0_6 = arith.constant 0 : index
    %47 = vector.load %arg3[%c0_5, %c0_6] : memref<32x96xbf16, #tpu.memory_space<vmem>>, vector<32x96xbf16>
    %cst_7 = arith.constant dense<0.000000e+00> : vector<64x96xf32>
    %48 = tpu.matmul %46, %47, %cst_7 {dimension_numbers = #tpu.dot_dimension_numbers<[1], [0], [0], [1], [0, 0, 1, 1], [], []>} : vector<64x32xbf16>, vector<32x96xbf16>, vector<64x96xf32> -> vector<64x96xf32>
    %c0_8 = arith.constant 0 : index
    %c0_9 = arith.constant 0 : index
    %49 = vector.load %arg4[%c0_8, %c0_9] : memref<1x96xf32, #tpu.memory_space<vmem>>, vector<1x96xf32>
    %50 = vector.broadcast %49 : vector<1x96xf32> to vector<64x96xf32>
    %51 = arith.addf %48, %50 : vector<64x96xf32>
    %52 = tpu.iota {dimensions = array<i32: 1>} : vector<1x96xi32>
    %c32_i32 = arith.constant 32 : i32
    %53 = vector.broadcast %c32_i32 : i32 to vector<1x96xi32>
    %54 = arith.cmpi slt, %52, %53 : vector<1x96xi32>
    %55 = math.tanh %51 : vector<64x96xf32>
    %56 = vector.shape_cast %54 : vector<1x96xi1> to vector<1x96xi1>
    %57 = vector.broadcast %56 : vector<1x96xi1> to vector<64x96xi1>
    %58 = arith.select %57, %51, %55 : vector<64x96xi1>, vector<64x96xf32>
    %59 = arith.truncf %58 : vector<64x96xf32> to vector<64x96xbf16>
    %c0_10 = arith.constant 0 : index
    %c0_11 = arith.constant 0 : index
    %60 = vector.load %arg5[%c0_10, %c0_11] : memref<96x16xbf16, #tpu.memory_space<vmem>>, vector<96x16xbf16>
    %cst_12 = arith.constant dense<0.000000e+00> : vector<64x16xf32>
    %61 = tpu.matmul %59, %60, %cst_12 {dimension_numbers = #tpu.dot_dimension_numbers<[1], [0], [0], [1], [0, 0, 1, 1], [], []>} : vector<64x96xbf16>, vector<96x16xbf16>, vector<64x16xf32> -> vector<64x16xf32>
    %c0_13 = arith.constant 0 : index
    %c0_14 = arith.constant 0 : index
    %62 = vector.load %arg6[%c0_13, %c0_14] : memref<1x16xf32, #tpu.memory_space<vmem>>, vector<1x16xf32>
    %63 = vector.broadcast %62 : vector<1x16xf32> to vector<64x16xf32>
    %64 = arith.addf %61, %63 : vector<64x16xf32>
    %65 = arith.addf %64, %6 : vector<64x16xf32>
    %cst_15 = arith.constant dense<0xFF800000> : vector<64xf32>
    %66 = vector.multi_reduction <maximumf>, %65, %cst_15 [1] : vector<64x16xf32> to vector<64xf32>
    %67 = vector.shape_cast %66 : vector<64xf32> to vector<64x1xf32>
    %68 = vector.broadcast %67 : vector<64x1xf32> to vector<64x16xf32>
    %69 = arith.subf %65, %68 : vector<64x16xf32>
    %70 = math.exp %69 : vector<64x16xf32>
    %cst_16 = arith.constant dense<0.000000e+00> : vector<64xf32>
    %71 = vector.multi_reduction <add>, %70, %cst_16 [1] : vector<64x16xf32> to vector<64xf32>
    %72 = vector.shape_cast %71 : vector<64xf32> to vector<64x1xf32>
    %73 = tpu.reciprocal %72 : vector<64x1xf32> -> vector<64x1xf32>
    %74 = vector.broadcast %73 : vector<64x1xf32> to vector<64x16xf32>
    %75 = arith.mulf %70, %74 : vector<64x16xf32>
    %c0_17 = arith.constant 0 : index
    %c0_18 = arith.constant 0 : index
    %76 = vector.load %arg7[%c0_17, %c0_18] : memref<64x16xf32, #tpu.memory_space<vmem>>, vector<64x16xf32>
    tpu.vector_store %arg7[%c0_17, %c0_18], %75 {strides = array<i32>} : memref<64x16xf32, #tpu.memory_space<vmem>>, vector<64x16xf32>,
    return
  }
  func.func @transform_0(%arg0: i32) -> (i32, i32) {
    %c0_i32 = arith.constant 0 : i32
    %c0_i32_0 = arith.constant 0 : i32
    return %arg0, %c0_i32 : i32, i32
  }
  func.func @transform_1(%arg0: i32) -> (i32, i32) {
    %c0_i32 = arith.constant 0 : i32
    %c0_i32_0 = arith.constant 0 : i32
    %c0_i32_1 = arith.constant 0 : i32
    return %c0_i32, %c0_i32_0 : i32, i32
  }
  func.func @transform_2(%arg0: i32) -> (i32, i32) {
    %c0_i32 = arith.constant 0 : i32
    %c0_i32_0 = arith.constant 0 : i32
    %c0_i32_1 = arith.constant 0 : i32
    return %c0_i32, %c0_i32_0 : i32, i32
  }
  func.func @transform_3(%arg0: i32) -> (i32, i32) {
    %c0_i32 = arith.constant 0 : i32
    %c0_i32_0 = arith.constant 0 : i32
    %c0_i32_1 = arith.constant 0 : i32
    return %c0_i32, %c0_i32_0 : i32, i32
  }
  func.func @transform_4(%arg0: i32) -> (i32, i32) {
    %c0_i32 = arith.constant 0 : i32
    %c0_i32_0 = arith.constant 0 : i32
    %c0_i32_1 = arith.constant 0 : i32
    return %c0_i32, %c0_i32_0 : i32, i32
  }
  func.func @transform_5(%arg0: i32) -> (i32, i32) {
    %c0_i32 = arith.constant 0 : i32
    %c0_i32_0 = arith.constant 0 : i32
    %c0_i32_1 = arith.constant 0 : i32
    return %c0_i32, %c0_i32_0 : i32, i32
  }
  func.func @transform_6(%arg0: i32) -> (i32, i32) {
    %c0_i32 = arith.constant 0 : i32
    %c0_i32_0 = arith.constant 0 : i32
    return %arg0, %c0_i32 : i32, i32
  }
}

</mosaic_0001>

<llo_original>
// kernel: tpu_custom_call.1
$region0: #{tpu_custom_call.1}
  #allocation0 [shape = 'u32[]', space=smem, size = 0x4, offset = 0x4, fixed_abs, tag = 'smem constant byte address 0x4 - core index']
  #allocation1 [shape = 'u32[144,128]{1,0:T(1,128)}', space=vmem, size = 0x12000, scoped, tag = 'internal scratch']
  %s0 = inlined_call_operand.vmem [shape: bf16[128,48], index: 0, kind: input, shape index: {}]
  %s1 = inlined_call_operand.vmem [shape: f32[1,32], index: 1, kind: input, shape index: {}]
  %s2 = inlined_call_operand.vmem [shape: bf16[32,96], index: 2, kind: input, shape index: {}]
  %s3 = inlined_call_operand.vmem [shape: f32[1,96], index: 3, kind: input, shape index: {}]
  %s4 = inlined_call_operand.vmem [shape: bf16[96,16], index: 4, kind: input, shape index: {}]
  %s5 = inlined_call_operand.vmem [shape: f32[1,16], index: 5, kind: input, shape index: {}]
  %s6 = inlined_call_operand.vmem [shape: f32[128,16], index: 6, kind: output, shape index: {}]
  %s7 = sld [smem:[#allocation0]]
  $region57: #{tpu_custom_call.1} parent=0
    _
  %s9 = ssub.s32 1, %s7
  %s10 = scalar_select 0, %s9, %s7
  loop: start=0, step=1, limit=4
  $region2: #{tpu_custom_call.1} parent=0 // loop_pre_header
    _
  $region3: #{tpu_custom_call.1} parent=0 // loop_header
    %s12 = sphi 0, %s16
    %p13 = scmp.ge.s32.totalorder %s12, 4
    %s22 = sphi 0, %s24
    %s25 = sphi 0, %s22
    %s26 = sphi 0, %s25
    %s42 = sphi 0, %s26
    %s46 = sphi 0, %s46
    %s48 = sphi 0, %s46
    %s49 = sphi 0, %s48
    %s63 = sphi 0, %s49
    %s67 = sphi 0, %s67
    %s69 = sphi 0, %s67
    %s70 = sphi 0, %s69
    %s84 = sphi 0, %s70
    %s88 = sphi 0, %s88
    %s90 = sphi 0, %s88
    %s91 = sphi 0, %s90
    %s105 = sphi 0, %s91
    %s109 = sphi 0, %s109
    %s111 = sphi 0, %s109
    %s112 = sphi 0, %s111
    %s126 = sphi 0, %s112
    %s130 = sphi 0, %s130
    %s132 = sphi 0, %s130
    %s133 = sphi 0, %s132
    %s147 = sphi 0, %s133
    %s153 = sphi 0, %s155
    %s156 = sphi 0, %s153
    %s157 = sphi 0, %s156
    %s173 = sphi 0, %s157
  $region4: #{tpu_custom_call.1} parent=0 // loop_header_branch
    %15 = sbr.rel (%p13) target = $region8
  $region5: #{tpu_custom_call.1} parent=0 // loop_body
    %s17 = ssub.s32 %s12, 1
    %s18 = ssub.s32 %s12, 2
    %s19 = sadd.s32 %s12, 1
    %s20 = ssub.s32 %s12, %s19
    %p21 = scmp.eq.s32.totalorder %s20, 0
    %s23 = sadd.s32 %s22, 1
    %s24 = scalar_select %p21, %s22, %s23
    %p27 = pneg %p21
    %p28 = scmp.eq.s32.totalorder %s12, 1
    %p29 = por %p27, %p28
    %p30 = scmp.ne.s32.totalorder %s22, %s25
    %p31 = scmp.eq.s32.totalorder %s12, 0
    %p32 = por %p30, %p31
    %p33 = scmp.ne.s32.totalorder %s22, %s25
    %p34 = scmp.eq.s32.totalorder %s17, 1
    %p35 = por %p33, %p34
    %p36 = scmp.ne.s32.totalorder %s25, %s26
    %p37 = scmp.eq.s32.totalorder %s17, 0
    %p38 = por %p36, %p37
    %p39 = scmp.ne.s32.totalorder %s25, %s26
    %p40 = scmp.eq.s32.totalorder %s18, 1
    %p41 = por %p39, %p40
    %p43 = scmp.ne.s32.totalorder %s26, %s42
    %p44 = scmp.eq.s32.totalorder %s18, 0
    %p45 = por %p43, %p44
    %s47 = sadd.s32 %s46, 1
    %p50 = scmp.eq.s32.totalorder %s12, 1
    %p51 = scmp.ne.s32.totalorder %s46, %s48
    %p52 = scmp.eq.s32.totalorder %s12, 0
    %p53 = por %p51, %p52
    %p54 = scmp.ne.s32.totalorder %s46, %s48
    %p55 = scmp.eq.s32.totalorder %s17, 1
    %p56 = por %p54, %p55
    %p57 = scmp.ne.s32.totalorder %s48, %s49
    %p58 = scmp.eq.s32.totalorder %s17, 0
    %p59 = por %p57, %p58
    %p60 = scmp.ne.s32.totalorder %s48, %s49
    %p61 = scmp.eq.s32.totalorder %s18, 1
    %p62 = por %p60, %p61
    %p64 = scmp.ne.s32.totalorder %s49, %s63
    %p65 = scmp.eq.s32.totalorder %s18, 0
    %p66 = por %p64, %p65
    %s68 = sadd.s32 %s67, 1
    %p71 = scmp.eq.s32.totalorder %s12, 1
    %p72 = scmp.ne.s32.totalorder %s67, %s69
    %p73 = scmp.eq.s32.totalorder %s12, 0
    %p74 = por %p72, %p73
    %p75 = scmp.ne.s32.totalorder %s67, %s69
    %p76 = scmp.eq.s32.totalorder %s17, 1
    %p77 = por %p75, %p76
    %p78 = scmp.ne.s32.totalorder %s69, %s70
    %p79 = scmp.eq.s32.totalorder %s17, 0
    %p80 = por %p78, %p79
    %p81 = scmp.ne.s32.totalorder %s69, %s70
    %p82 = scmp.eq.s32.totalorder %s18, 1
    %p83 = por %p81, %p82
    %p85 = scmp.ne.s32.totalorder %s70, %s84
    %p86 = scmp.eq.s32.totalorder %s18, 0
    %p87 = por %p85, %p86
    %s89 = sadd.s32 %s88, 1
    %p92 = scmp.eq.s32.totalorder %s12, 1
    %p93 = scmp.ne.s32.totalorder %s88, %s90
    %p94 = scmp.eq.s32.totalorder %s12, 0
    %p95 = por %p93, %p94
    %p96 = scmp.ne.s32.totalorder %s88, %s90
    %p97 = scmp.eq.s32.totalorder %s17, 1
    %p98 = por %p96, %p97
    %p99 = scmp.ne.s32.totalorder %s90, %s91
    %p100 = scmp.eq.s32.totalorder %s17, 0
    %p101 = por %p99, %p100
    %p102 = scmp.ne.s32.totalorder %s90, %s91
    %p103 = scmp.eq.s32.totalorder %s18, 1
    %p104 = por %p102, %p103
    %p106 = scmp.ne.s32.totalorder %s91, %s105
    %p107 = scmp.eq.s32.totalorder %s18, 0
    %p108 = por %p106, %p107
    %s110 = sadd.s32 %s109, 1
    %p113 = scmp.eq.s32.totalorder %s12, 1
    %p114 = scmp.ne.s32.totalorder %s109, %s111
    %p115 = scmp.eq.s32.totalorder %s12, 0
    %p116 = por %p114, %p115
    %p117 = scmp.ne.s32.totalorder %s109, %s111
    %p118 = scmp.eq.s32.totalorder %s17, 1
    %p119 = por %p117, %p118
    %p120 = scmp.ne.s32.totalorder %s111, %s112
    %p121 = scmp.eq.s32.totalorder %s17, 0
    %p122 = por %p120, %p121
    %p123 = scmp.ne.s32.totalorder %s111, %s112
    %p124 = scmp.eq.s32.totalorder %s18, 1
    %p125 = por %p123, %p124
    %p127 = scmp.ne.s32.totalorder %s112, %s126
    %p128 = scmp.eq.s32.totalorder %s18, 0
    %p129 = por %p127, %p128
    %s131 = sadd.s32 %s130, 1
    %p134 = scmp.eq.s32.totalorder %s12, 1
    %p135 = scmp.ne.s32.totalorder %s130, %s132
    %p136 = scmp.eq.s32.totalorder %s12, 0
    %p137 = por %p135, %p136
    %p138 = scmp.ne.s32.totalorder %s130, %s132
    %p139 = scmp.eq.s32.totalorder %s17, 1
    %p140 = por %p138, %p139
    %p141 = scmp.ne.s32.totalorder %s132, %s133
    %p142 = scmp.eq.s32.totalorder %s17, 0
    %p143 = por %p141, %p142
    %p144 = scmp.ne.s32.totalorder %s132, %s133
    %p145 = scmp.eq.s32.totalorder %s18, 1
    %p146 = por %p144, %p145
    %p148 = scmp.ne.s32.totalorder %s133, %s147
    %p149 = scmp.eq.s32.totalorder %s18, 0
    %p150 = por %p148, %p149
    %s151 = ssub.s32 %s12, %s19
    %p152 = scmp.eq.s32.totalorder %s151, 0
    %s154 = sadd.s32 %s153, 1
    %s155 = scalar_select %p152, %s153, %s154
    %p158 = pneg %p152
    %p159 = scmp.eq.s32.totalorder %s12, 1
    %p160 = por %p158, %p159
    %p161 = scmp.ne.s32.totalorder %s153, %s156
    %p162 = scmp.eq.s32.totalorder %s12, 0
    %p163 = por %p161, %p162
    %p164 = scmp.ne.s32.totalorder %s153, %s156
    %p165 = scmp.eq.s32.totalorder %s17, 1
    %p166 = por %p164, %p165
    %p167 = scmp.ne.s32.totalorder %s156, %s157
    %p168 = scmp.eq.s32.totalorder %s17, 0
    %p169 = por %p167, %p168
    %p170 = scmp.ne.s32.totalorder %s156, %s157
    %p171 = scmp.eq.s32.totalorder %s18, 1
    %p172 = por %p170, %p171
    %p174 = scmp.ne.s32.totalorder %s157, %s173
    %p175 = scmp.eq.s32.totalorder %s18, 0
    %p176 = por %p174, %p175
    %p177 = scmp.le.s32.totalorder 1, %s12
    %p178 = scmp.lt.s32.totalorder %s12, 3
    %p179 = pnand %p177, %p178
    %p180 = pneg %p179
    // Predicated region
    $region9: #{tpu_custom_call.1} parent=5 // pred_check
      _
    $region10: #{tpu_custom_call.1} parent=5 // pred_check_branch
      %182 = sbr.rel (%p179) target = $region12
    $region11: #{tpu_custom_call.1} parent=5 // pred_region
      %s183 = ssub.s32 %s12, 1
      // Predicated region
      $region13: #{tpu_custom_call.1} parent=11 // pred_check
        %p184 = pneg %p59
      $region14: #{tpu_custom_call.1} parent=11 // pred_check_branch
        %186 = sbr.rel (%p184) target = $region16
      $region15: #{tpu_custom_call.1} parent=11 // pred_region
        _
      $region16: #{tpu_custom_call.1} parent=11 // pred_fallthru
        _
      // Predicated region
      $region17: #{tpu_custom_call.1} parent=11 // pred_check
        %p187 = pneg %p80
      $region18: #{tpu_custom_call.1} parent=11 // pred_check_branch
        %189 = sbr.rel (%p187) target = $region20
      $region19: #{tpu_custom_call.1} parent=11 // pred_region
        _
      $region20: #{tpu_custom_call.1} parent=11 // pred_fallthru
        _
      // Predicated region
      $region21: #{tpu_custom_call.1} parent=11 // pred_check
        %p190 = pneg %p101
      $region22: #{tpu_custom_call.1} parent=11 // pred_check_branch
        %192 = sbr.rel (%p190) target = $region24
      $region23: #{tpu_custom_call.1} parent=11 // pred_region
        _
      $region24: #{tpu_custom_call.1} parent=11 // pred_fallthru
        _
      // Predicated region
      $region25: #{tpu_custom_call.1} parent=11 // pred_check
        %p193 = pneg %p122
      $region26: #{tpu_custom_call.1} parent=11 // pred_check_branch
        %195 = sbr.rel (%p193) target = $region28
      $region27: #{tpu_custom_call.1} parent=11 // pred_region
        _
      $region28: #{tpu_custom_call.1} parent=11 // pred_fallthru
        _
      // Predicated region
      $region29: #{tpu_custom_call.1} parent=11 // pred_check
        %p196 = pneg %p143
      $region30: #{tpu_custom_call.1} parent=11 // pred_check_branch
        %198 = sbr.rel (%p196) target = $region32
      $region31: #{tpu_custom_call.1} parent=11 // pred_region
        _
      $region32: #{tpu_custom_call.1} parent=11 // pred_fallthru
        _
    $region12: #{tpu_custom_call.1} parent=5 // pred_fallthru
      _
    %p199 = scmp.lt.s32.totalorder %s12, 2
    // Predicated region
    $region33: #{tpu_custom_call.1} parent=5 // pred_check
      %p200 = pneg %p199
    $region34: #{tpu_custom_call.1} parent=5 // pred_check_branch
      %202 = sbr.rel (%p200) target = $region36
    $region35: #{tpu_custom_call.1} parent=5 // pred_region
      // Predicated region
      $region37: #{tpu_custom_call.1} parent=35 // pred_check
        %p203 = pneg %p32
      $region38: #{tpu_custom_call.1} parent=35 // pred_check_branch
        %205 = sbr.rel (%p203) target = $region40
      $region39: #{tpu_custom_call.1} parent=35 // pred_region
        %s206 = smul.u32 8, %s12
        %p207 = scmp.lt.s32.totalorder %s206, 15
        %s208 = scalar_select %p207, %s206, 15
        %s209 = smul.addr %s208, 4
        %s210 = scalar_lea.vmem %s0, %s209
        %s211 = smul.u32 8, %s12
      $region40: #{tpu_custom_call.1} parent=35 // pred_fallthru
        _
    $region36: #{tpu_custom_call.1} parent=5 // pred_fallthru
      _
    %p212 = scmp.le.s32.totalorder 1, %s12
    %p213 = scmp.lt.s32.totalorder %s12, 3
    %p214 = pnand %p212, %p213
    %p215 = pneg %p214
    // Predicated region
    $region41: #{tpu_custom_call.1} parent=5 // pred_check
      _
    $region42: #{tpu_custom_call.1} parent=5 // pred_check_branch
      %217 = sbr.rel (%p214) target = $region44
    $region43: #{tpu_custom_call.1} parent=5 // pred_region
      %s218 = ssub.s32 %s12, 1
      %s219 = smul.u32 8, %s17
      %p220 = scmp.lt.s32.totalorder %s219, 15
      %s221 = scalar_select %p220, %s219, 15
      %s222 = smul.addr %s221, 4
      %s223 = scalar_lea.vmem %s0, %s222
      %p224 = pneg %p38
      %p225 = pneg %p35
      %p226 = pneg %p59
      %p227 = pneg %p56
      %p228 = pneg %p80
      %p229 = pneg %p77
      %p230 = pneg %p101
      %p231 = pneg %p98
      %p232 = pneg %p122
      %p233 = pneg %p119
      %p234 = pneg %p143
      %p235 = pneg %p140
      %p236 = pneg %p169
      %p237 = pneg %p166
      %s238 = smul.u32 8, %s17
      %p239 = scmp.lt.s32.totalorder %s238, 15
      %s240 = scalar_select %p239, %s238, 15
      %s241 = smul.addr %s240, 8
      %s242 = scalar_lea.vmem %s6, %s241
      %s243 = smul.u32 8, %s17
      %p244 = scmp.lt.s32.totalorder %s243, 15
      %s245 = scalar_select %p244, %s243, 15
      %s246 = smul.addr %s245, 4
      %s247 = scalar_lea.vmem %s0, %s246
      %s248 = smul.u32 8, %s17
      %s249 = smul.u32 8, %s17
      %p250 = scmp.lt.s32.totalorder %s249, 15
      %s251 = scalar_select %p250, %s249, 15
      %s252 = smul.addr %s251, 8
      %s253 = scalar_lea.vmem %s6, %s252
      %s254 = smul.u32 8, %s17
      %v256 = vld [vmem:[%s247] sm:$0xf]
      %v257 = vld [vmem:[%s247 + $0x4] sm:$0xf]
      %v258 = vld [vmem:[%s247 + $0x8] sm:$0xf]
      %v259 = vld [vmem:[%s247 + $0xc] sm:$0xf]
      %v260 = vld [vmem:[%s247 + $0x10] sm:$0xf]
      %v261 = vld [vmem:[%s247 + $0x14] sm:$0xf]
      %v262 = vld [vmem:[%s247 + $0x18] sm:$0xf]
      %v263 = vld [vmem:[%s247 + $0x1c] sm:$0xf]
      %v264 = vunpack.c.l.bf16 %v256
      %v265 = vunpack.c.l.bf16 %v257
      %v266 = vunpack.c.l.bf16 %v258
      %v267 = vunpack.c.l.bf16 %v259
      %v268 = vunpack.c.l.bf16 %v260
      %v269 = vunpack.c.l.bf16 %v261
      %v270 = vunpack.c.l.bf16 %v262
      %v271 = vunpack.c.l.bf16 %v263
      %v272 = vld [vmem:[%s1] sm:$0x1]
      %v274 = vlaneseq
      %v275 = vshrl.u32 %v274, 7
      %v276 = vsub.s32 0, %v275
      %v277 = vrot.slane %v272, %v276
      %v279 = vmul.f32 %v264, %v277
      %v280 = vmul.f32 %v265, %v277
      %v281 = vmul.f32 %v266, %v277
      %v282 = vmul.f32 %v267, %v277
      %v283 = vmul.f32 %v268, %v277
      %v284 = vmul.f32 %v269, %v277
      %v285 = vmul.f32 %v270, %v277
      %v286 = vmul.f32 %v271, %v277
      %v287 = vand.u32 2147483647, %v279
      %v288 = vand.u32 2147483647, %v280
      %v289 = vand.u32 2147483647, %v281
      %v290 = vand.u32 2147483647, %v282
      %v291 = vand.u32 2147483647, %v283
      %v292 = vand.u32 2147483647, %v284
      %v293 = vand.u32 2147483647, %v285
      %v294 = vand.u32 2147483647, %v286
      %303 = vrot.lane.b32.xlu0 %v287, 127
      %v304 = vpop.permute.xlu0 %303
      %305 = vrot.lane.b32.xlu0 %v288, 127
      %v306 = vpop.permute.xlu0 %305
      %307 = vrot.lane.b32.xlu0 %v289, 127
      %v308 = vpop.permute.xlu0 %307
      %309 = vrot.lane.b32.xlu0 %v290, 127
      %v310 = vpop.permute.xlu0 %309
      %311 = vrot.lane.b32.xlu0 %v291, 127
      %v312 = vpop.permute.xlu0 %311
      %313 = vrot.lane.b32.xlu0 %v292, 127
      %v314 = vpop.permute.xlu0 %313
      %315 = vrot.lane.b32.xlu0 %v293, 127
      %v316 = vpop.permute.xlu0 %315
      %317 = vrot.lane.b32.xlu0 %v294, 127
      %v318 = vpop.permute.xlu0 %317
      %v327 = vadd.f32 %v287, %v304
      %v328 = vadd.f32 %v288, %v306
      %v329 = vadd.f32 %v289, %v308
      %v330 = vadd.f32 %v290, %v310
      %v331 = vadd.f32 %v291, %v312
      %v332 = vadd.f32 %v292, %v314
      %v333 = vadd.f32 %v293, %v316
      %v334 = vadd.f32 %v294, %v318
      %v335 = vadd.f32 %v327, 1.0
      %v336 = vadd.f32 %v328, 1.0
      %v337 = vadd.f32 %v329, 1.0
      %v338 = vadd.f32 %v330, 1.0
      %v339 = vadd.f32 %v331, 1.0
      %v340 = vadd.f32 %v332, 1.0
      %v341 = vadd.f32 %v333, 1.0
      %v342 = vadd.f32 %v334, 1.0
      %v343 = vrcp.pop %v335
      %v344 = vrcp.pop %v336
      %v345 = vrcp.pop %v337
      %v346 = vrcp.pop %v338
      %v347 = vrcp.pop %v339
      %v348 = vrcp.pop %v340
      %v349 = vrcp.pop %v341
      %v350 = vrcp.pop %v342
      %v351 = vlaneseq
      %v352 = vand.u32 %v351, 127
      %vm353 = vcmp.eq.s32.totalorder %v352, 4
      %vm354 = vcmp.eq.s32.totalorder %v352, 5
      %vm355 = vmor %vm353, %vm354
      %vm356 = vcmp.eq.s32.totalorder %v352, 8
      %vm357 = vcmp.eq.s32.totalorder %v352, 9
      %vm358 = vmor %vm356, %vm357
      %v359 = vsel %vm358, 1, 0
      %vm360 = vcmp.eq.s32.totalorder %v359, 1
      %362 = vset.pattern.permute.xlu0 8
      %363 = vperm.xlu0 %362, %v343
      %v364 = vpop.permute.xlu0 %363
      %367 = vset.pattern.permute.xlu0 8
      %368 = vperm.xlu0 %367, %v344
      %v369 = vpop.permute.xlu0 %368
      %372 = vset.pattern.permute.xlu0 8
      %373 = vperm.xlu0 %372, %v345
      %v374 = vpop.permute.xlu0 %373
      %377 = vset.pattern.permute.xlu0 8
      %378 = vperm.xlu0 %377, %v346
      %v379 = vpop.permute.xlu0 %378
      %382 = vset.pattern.permute.xlu0 8
      %383 = vperm.xlu0 %382, %v347
      %v384 = vpop.permute.xlu0 %383
      %387 = vset.pattern.permute.xlu0 8
      %388 = vperm.xlu0 %387, %v348
      %v389 = vpop.permute.xlu0 %388
      %392 = vset.pattern.permute.xlu0 8
      %393 = vperm.xlu0 %392, %v349
      %v394 = vpop.permute.xlu0 %393
      %397 = vset.pattern.permute.xlu0 8
      %398 = vperm.xlu0 %397, %v350
      %v399 = vpop.permute.xlu0 %398
      %v401 = vsel %vm360, %v364, 1.0
      %v402 = vsel %vm360, %v369, 1.0
      %v403 = vsel %vm360, %v374, 1.0
      %v404 = vsel %vm360, %v379, 1.0
      %v405 = vsel %vm360, %v384, 1.0
      %v406 = vsel %vm360, %v389, 1.0
      %v407 = vsel %vm360, %v394, 1.0
      %v408 = vsel %vm360, %v399, 1.0
      %v409 = vsel %vm355, 1, 0
      %vm410 = vcmp.eq.s32.totalorder %v409, 1
      %411 = vset.pattern.permute.xlu0 4
      %412 = vperm.xlu0 %411, %v343
      %v413 = vpop.permute.xlu0 %412
      %415 = vset.pattern.permute.xlu0 4
      %416 = vperm.xlu0 %415, %v344
      %v417 = vpop.permute.xlu0 %416
      %419 = vset.pattern.permute.xlu0 4
      %420 = vperm.xlu0 %419, %v345
      %v421 = vpop.permute.xlu0 %420
      %423 = vset.pattern.permute.xlu0 4
      %424 = vperm.xlu0 %423, %v346
      %v425 = vpop.permute.xlu0 %424
      %427 = vset.pattern.permute.xlu0 4
      %428 = vperm.xlu0 %427, %v347
      %v429 = vpop.permute.xlu0 %428
      %431 = vset.pattern.permute.xlu0 4
      %432 = vperm.xlu0 %431, %v348
      %v433 = vpop.permute.xlu0 %432
      %435 = vset.pattern.permute.xlu0 4
      %436 = vperm.xlu0 %435, %v349
      %v437 = vpop.permute.xlu0 %436
      %439 = vset.pattern.permute.xlu0 4
      %440 = vperm.xlu0 %439, %v350
      %v441 = vpop.permute.xlu0 %440
      %v443 = vsel %vm410, %v413, %v401
      %v444 = vsel %vm410, %v417, %v402
      %v445 = vsel %vm410, %v421, %v403
      %v446 = vsel %vm410, %v425, %v404
      %v447 = vsel %vm410, %v429, %v405
      %v448 = vsel %vm410, %v433, %v406
      %v449 = vsel %vm410, %v437, %v407
      %v450 = vsel %vm410, %v441, %v408
      %v451 = vmul.f32 %v279, %v443
      %v452 = vmul.f32 %v280, %v444
      %v453 = vmul.f32 %v281, %v445
      %v454 = vmul.f32 %v282, %v446
      %v455 = vmul.f32 %v283, %v447
      %v456 = vmul.f32 %v284, %v448
      %v457 = vmul.f32 %v285, %v449
      %v458 = vmul.f32 %v286, %v450
      %v459 = vpack.c.bf16 %v452, %v451
      %v460 = vpack.c.bf16 %v454, %v453
      %v461 = vpack.c.bf16 %v456, %v455
      %v462 = vpack.c.bf16 %v458, %v457
      %v463 = vld [vmem:[%s2] sm:$0xf]
      %v464 = vld [vmem:[%s2 + $0x4] sm:$0xf]
      %v465 = vld [vmem:[%s2 + $0x8] sm:$0xf]
      %v466 = vld [vmem:[%s2 + $0xc] sm:$0xf]
      %v467 = vld [vmem:[%s3] sm:$0x1]
      %v469 = vlaneseq
      %v470 = vshrl.u32 %v469, 7
      %v471 = vsub.s32 0, %v470
      %v472 = vrot.slane %v467, %v471
      %v478 = vunpack.c.l.b16 %v463
      %v479 = vunpack.c.l.b16 %v464
      %v480 = vunpack.c.l.b16 %v465
      %v481 = vunpack.c.l.b16 %v466
      %v482 = vpack.c.b16 %v479, %v478
      %v483 = vpack.c.b16 %v481, %v480
      %vm486 = vcmask 261120
      %v488 = vsel %vm486, %v459, 0
      %v491 = vsel %vm486, %v460, 0
      %v494 = vsel %vm486, %v461, 0
      %v497 = vsel %vm486, %v462, 0
      %499 = vmatprep.subr.bf16.mxu0 0
      %500 = vmatpush1.bf16.msra.mxu0 %v482
      %501 = vmatprep.subr.bf16.mxu0 0
      %502 = vmatpush1.bf16.msra.mxu0 %v483
      %503 = vmatprep.subr.bf16.mxu0 0
      %504 = vmatpush1.bf16.msra.mxu0 0
      %505 = vmatprep.subr.bf16.mxu0 0
      %506 = vmatpush1.bf16.msra.mxu0 0
      %507 = vmatprep.subr.bf16.mxu0 0
      %508 = vmatpush1.bf16.msra.mxu0 0
      %509 = vmatprep.subr.bf16.mxu0 0
      %510 = vmatpush1.bf16.msra.mxu0 0
      %511 = vmatprep.subr.bf16.mxu0 0
      %512 = vmatpush1.bf16.msra.mxu0 0
      %513 = vmatprep.subr.bf16.mxu0 0
      %514 = vmatpush1.bf16.msra.mxu0 0
      %515 = vmatprep.subr.bf16.mxu0 0
      %516 = vmatpush1.bf16.msra.mxu0 0
      %517 = vmatprep.subr.bf16.mxu0 0
      %518 = vmatpush1.bf16.msra.mxu0 0
      %519 = vmatprep.subr.bf16.mxu0 0
      %520 = vmatpush1.bf16.msra.mxu0 0
      %521 = vmatprep.subr.bf16.mxu0 0
      %522 = vmatpush1.bf16.msra.mxu0 0
      %523 = vmatprep.subr.bf16.mxu0 0
      %524 = vmatpush1.bf16.msra.mxu0 0
      %525 = vmatprep.subr.bf16.mxu0 0
      %526 = vmatpush1.bf16.msra.mxu0 0
      %527 = vmatprep.subr.bf16.mxu0 0
      %528 = vmatpush1.bf16.msra.mxu0 0
      %529 = vmatprep.subr.bf16.mxu0 0
      %530 = vmatpush1.bf16.msra.mxu0 0
      %531 = vmatprep.mubr.bf16.mxu0 0
      %532 = vmatmul.mubr.bf16.gmra.mrb[0].mxu0 %v488
      %v533 = vpop.f32.mrb[0].mxu0
      %v534 = vadd.f32 %v472, %v533
      %v535 = vpop.f32.mrb[0].mxu0
      %v536 = vpop.f32.mrb[0].mxu0
      %v537 = vadd.f32 %v472, %v536
      %v538 = vpop.f32.mrb[0].mxu0
      %539 = vmatprep.mubr.bf16.mxu0 0
      %540 = vmatmul.mubr.bf16.gmra.mrb[0].mxu0 %v491
      %v541 = vpop.f32.mrb[0].mxu0
      %v542 = vadd.f32 %v472, %v541
      %v543 = vpop.f32.mrb[0].mxu0
      %v544 = vpop.f32.mrb[0].mxu0
      %v545 = vadd.f32 %v472, %v544
      %v546 = vpop.f32.mrb[0].mxu0
      %547 = vmatprep.mubr.bf16.mxu0 0
      %548 = vmatmul.mubr.bf16.gmra.mrb[0].mxu0 %v494
      %v549 = vpop.f32.mrb[0].mxu0
      %v550 = vadd.f32 %v472, %v549
      %v551 = vpop.f32.mrb[0].mxu0
      %v552 = vpop.f32.mrb[0].mxu0
      %v553 = vadd.f32 %v472, %v552
      %v554 = vpop.f32.mrb[0].mxu0
      %555 = vmatprep.mubr.bf16.mxu0 0
      %556 = vmatmul.mubr.bf16.gmra.mrb[0].mxu0 %v497
      %v557 = vpop.f32.mrb[0].mxu0
      %v558 = vadd.f32 %v472, %v557
      %v559 = vpop.f32.mrb[0].mxu0
      %v560 = vpop.f32.mrb[0].mxu0
      %v561 = vadd.f32 %v472, %v560
      %v562 = vpop.f32.mrb[0].mxu0
      %563 = vdwg.mxu0
      %vm564 = vcmp.lt.s32.totalorder %v352, 32
      %v565 = vtanh.pop %v534
      %v566 = vtanh.pop %v537
      %v567 = vtanh.pop %v542
      %v568 = vtanh.pop %v545
      %v569 = vtanh.pop %v550
      %v570 = vtanh.pop %v553
      %v571 = vtanh.pop %v558
      %v572 = vtanh.pop %v561
      %v573 = vsel %vm564, 1, 0
      %vm574 = vcmp.eq.s32.totalorder %v573, 1
      %v575 = vsel %vm574, %v534, %v565
      %v576 = vsel %vm574, %v537, %v566
      %v577 = vsel %vm574, %v542, %v567
      %v578 = vsel %vm574, %v545, %v568
      %v579 = vsel %vm574, %v550, %v569
      %v580 = vsel %vm574, %v553, %v570
      %v581 = vsel %vm574, %v558, %v571
      %v582 = vsel %vm574, %v561, %v572
      %v583 = vpack.c.bf16 %v576, %v575
      %v584 = vpack.c.bf16 %v578, %v577
      %v585 = vpack.c.bf16 %v580, %v579
      %v586 = vpack.c.bf16 %v582, %v581
      %v587 = vld [vmem:[%s4] sm:$0xf]
      %v588 = vld [vmem:[%s4 + $0x4] sm:$0xf]
      %v589 = vld [vmem:[%s4 + $0x8] sm:$0xf]
      %v590 = vld [vmem:[%s4 + $0xc] sm:$0xf]
      %v591 = vld [vmem:[%s4 + $0x10] sm:$0xf]
      %v592 = vld [vmem:[%s4 + $0x14] sm:$0xf]
      %v593 = vld [vmem:[%s4 + $0x18] sm:$0xf]
      %v594 = vld [vmem:[%s4 + $0x1c] sm:$0xf]
      %v595 = vld [vmem:[%s4 + $0x20] sm:$0xf]
      %v596 = vld [vmem:[%s4 + $0x24] sm:$0xf]
      %v597 = vld [vmem:[%s4 + $0x28] sm:$0xf]
      %v598 = vld [vmem:[%s4 + $0x2c] sm:$0xf]
      %v599 = vld [vmem:[%s5] sm:$0x1]
      %v601 = vlaneseq
      %v602 = vshrl.u32 %v601, 7
      %v603 = vsub.s32 0, %v602
      %v604 = vrot.slane %v599, %v603
      %v618 = vunpack.c.l.b16 %v587
      %v619 = vunpack.c.l.b16 %v588
      %v620 = vunpack.c.l.b16 %v589
      %v621 = vunpack.c.l.b16 %v590
      %v622 = vunpack.c.l.b16 %v591
      %v623 = vunpack.c.l.b16 %v592
      %v624 = vunpack.c.l.b16 %v593
      %v625 = vunpack.c.l.b16 %v594
      %v626 = vunpack.c.l.b16 %v595
      %v627 = vunpack.c.l.b16 %v596
      %v628 = vunpack.c.l.b16 %v597
      %v629 = vunpack.c.l.b16 %v598
      %v630 = vpack.c.b16 %v619, %v618
      %v631 = vpack.c.b16 %v621, %v620
      %v632 = vpack.c.b16 %v623, %v622
      %v633 = vpack.c.b16 %v625, %v624
      %v634 = vpack.c.b16 %v627, %v626
      %v635 = vpack.c.b16 %v629, %v628
      %vm642 = vcmask 785408
      %v644 = vsel %vm642, %v583, 0
      %v647 = vsel %vm642, %v584, 0
      %v650 = vsel %vm642, %v585, 0
      %v653 = vsel %vm642, %v586, 0
      %655 = vmatprep.subr.bf16.mxu0 0
      %656 = vmatpush1.bf16.msra.mxu0 %v630
      %657 = vmatprep.subr.bf16.mxu0 0
      %658 = vmatpush1.bf16.msra.mxu0 %v631
      %659 = vmatprep.subr.bf16.mxu0 0
      %660 = vmatpush1.bf16.msra.mxu0 %v632
      %661 = vmatprep.subr.bf16.mxu0 0
      %662 = vmatpush1.bf16.msra.mxu0 %v633
      %663 = vmatprep.subr.bf16.mxu0 0
      %664 = vmatpush1.bf16.msra.mxu0 %v634
      %665 = vmatprep.subr.bf16.mxu0 0
      %666 = vmatpush1.bf16.msra.mxu0 %v635
      %667 = vmatprep.subr.bf16.mxu0 0
      %668 = vmatpush1.bf16.msra.mxu0 0
      %669 = vmatprep.subr.bf16.mxu0 0
      %670 = vmatpush1.bf16.msra.mxu0 0
      %671 = vmatprep.subr.bf16.mxu0 0
      %672 = vmatpush1.bf16.msra.mxu0 0
      %673 = vmatprep.subr.bf16.mxu0 0
      %674 = vmatpush1.bf16.msra.mxu0 0
      %675 = vmatprep.subr.bf16.mxu0 0
      %676 = vmatpush1.bf16.msra.mxu0 0
      %677 = vmatprep.subr.bf16.mxu0 0
      %678 = vmatpush1.bf16.msra.mxu0 0
      %679 = vmatprep.subr.bf16.mxu0 0
      %680 = vmatpush1.bf16.msra.mxu0 0
      %681 = vmatprep.subr.bf16.mxu0 0
      %682 = vmatpush1.bf16.msra.mxu0 0
      %683 = vmatprep.subr.bf16.mxu0 0
      %684 = vmatpush1.bf16.msra.mxu0 0
      %685 = vmatprep.subr.bf16.mxu0 0
      %686 = vmatpush1.bf16.msra.mxu0 0
      %687 = vmatprep.mubr.bf16.mxu0 0
      %688 = vmatmul.mubr.bf16.gmra.mrb[0].mxu0 %v644
      %v689 = vpop.f32.mrb[0].mxu0
      %v690 = vadd.f32 %v604, %v689
      %v691 = vpop.f32.mrb[0].mxu0
      %v692 = vpop.f32.mrb[0].mxu0
      %v693 = vadd.f32 %v604, %v692
      %v694 = vpop.f32.mrb[0].mxu0
      %695 = vmatprep.mubr.bf16.mxu0 0
      %696 = vmatmul.mubr.bf16.gmra.mrb[0].mxu0 %v647
      %v697 = vpop.f32.mrb[0].mxu0
      %v698 = vadd.f32 %v604, %v697
      %v699 = vpop.f32.mrb[0].mxu0
      %v700 = vpop.f32.mrb[0].mxu0
      %v701 = vadd.f32 %v604, %v700
      %v702 = vpop.f32.mrb[0].mxu0
      %703 = vmatprep.mubr.bf16.mxu0 0
      %704 = vmatmul.mubr.bf16.gmra.mrb[0].mxu0 %v650
      %v705 = vpop.f32.mrb[0].mxu0
      %v706 = vadd.f32 %v604, %v705
      %v707 = vpop.f32.mrb[0].mxu0
      %v708 = vpop.f32.mrb[0].mxu0
      %v709 = vadd.f32 %v604, %v708
      %v710 = vpop.f32.mrb[0].mxu0
      %711 = vmatprep.mubr.bf16.mxu0 0
      %712 = vmatmul.mubr.bf16.gmra.mrb[0].mxu0 %v653
      %v713 = vpop.f32.mrb[0].mxu0
      %v714 = vadd.f32 %v604, %v713
      %v715 = vpop.f32.mrb[0].mxu0
      %v716 = vpop.f32.mrb[0].mxu0
      %v717 = vadd.f32 %v604, %v716
      %v718 = vpop.f32.mrb[0].mxu0
      %719 = vdwg.mxu0
      %728 = vrot.lane.b32.xlu0 %v264, 96
      %v729 = vpop.permute.xlu0 %728
      %730 = vrot.lane.b32.xlu0 %v265, 96
      %v731 = vpop.permute.xlu0 %730
      %732 = vrot.lane.b32.xlu0 %v266, 96
      %v733 = vpop.permute.xlu0 %732
      %734 = vrot.lane.b32.xlu0 %v267, 96
      %v735 = vpop.permute.xlu0 %734
      %736 = vrot.lane.b32.xlu0 %v268, 96
      %v737 = vpop.permute.xlu0 %736
      %738 = vrot.lane.b32.xlu0 %v269, 96
      %v739 = vpop.permute.xlu0 %738
      %740 = vrot.lane.b32.xlu0 %v270, 96
      %v741 = vpop.permute.xlu0 %740
      %742 = vrot.lane.b32.xlu0 %v271, 96
      %v743 = vpop.permute.xlu0 %742
      %v752 = vadd.f32 %v690, %v729
      %v753 = vadd.f32 %v693, %v731
      %v754 = vadd.f32 %v698, %v733
      %v755 = vadd.f32 %v701, %v735
      %v756 = vadd.f32 %v706, %v737
      %v757 = vadd.f32 %v709, %v739
      %v758 = vadd.f32 %v714, %v741
      %v759 = vadd.f32 %v717, %v743
      %vm760 = vcmask 130048
      %v761 = vsel %vm760, %v752, -inf
      %762 = vmax.xlane.f32.xlu0 %v761
      %v763 = vpop.xlane.xlu0 %762
      %v764 = vsel %vm760, %v753, -inf
      %765 = vmax.xlane.f32.xlu0 %v764
      %v766 = vpop.xlane.xlu0 %765
      %v767 = vsel %vm760, %v754, -inf
      %768 = vmax.xlane.f32.xlu0 %v767
      %v769 = vpop.xlane.xlu0 %768
      %v770 = vsel %vm760, %v755, -inf
      %771 = vmax.xlane.f32.xlu0 %v770
      %v772 = vpop.xlane.xlu0 %771
      %v773 = vsel %vm760, %v756, -inf
      %774 = vmax.xlane.f32.xlu0 %v773
      %v775 = vpop.xlane.xlu0 %774
      %v776 = vsel %vm760, %v757, -inf
      %777 = vmax.xlane.f32.xlu0 %v776
      %v778 = vpop.xlane.xlu0 %777
      %v779 = vsel %vm760, %v758, -inf
      %780 = vmax.xlane.f32.xlu0 %v779
      %v781 = vpop.xlane.xlu0 %780
      %v782 = vsel %vm760, %v759, -inf
      %783 = vmax.xlane.f32.xlu0 %v782
      %v784 = vpop.xlane.xlu0 %783
      %v785 = vsub.f32 %v752, %v763
      %v786 = vsub.f32 %v753, %v766
      %v787 = vsub.f32 %v754, %v769
      %v788 = vsub.f32 %v755, %v772
      %v789 = vsub.f32 %v756, %v775
      %v790 = vsub.f32 %v757, %v778
      %v791 = vsub.f32 %v758, %v781
      %v792 = vsub.f32 %v759, %v784
      %v793 = vmul.f32 %v785, 1.442695
      %v794 = vpow.pop %v793
      %v795 = vmul.f32 %v786, 1.442695
      %v796 = vpow.pop %v795
      %v797 = vmul.f32 %v787, 1.442695
      %v798 = vpow.pop %v797
      %v799 = vmul.f32 %v788, 1.442695
      %v800 = vpow.pop %v799
      %v801 = vmul.f32 %v789, 1.442695
      %v802 = vpow.pop %v801
      %v803 = vmul.f32 %v790, 1.442695
      %v804 = vpow.pop %v803
      %v805 = vmul.f32 %v791, 1.442695
      %v806 = vpow.pop %v805
      %v807 = vmul.f32 %v792, 1.442695
      %v808 = vpow.pop %v807
      %v809 = vsel %vm760, %v794, 0.0
      %810 = vadd.xlane.f32.xlu0 %v809
      %v811 = vpop.xlane.xlu0 %810
      %v812 = vsel %vm760, %v796, 0.0
      %813 = vadd.xlane.f32.xlu0 %v812
      %v814 = vpop.xlane.xlu0 %813
      %v815 = vsel %vm760, %v798, 0.0
      %816 = vadd.xlane.f32.xlu0 %v815
      %v817 = vpop.xlane.xlu0 %816
      %v818 = vsel %vm760, %v800, 0.0
      %819 = vadd.xlane.f32.xlu0 %v818
      %v820 = vpop.xlane.xlu0 %819
      %v821 = vsel %vm760, %v802, 0.0
      %822 = vadd.xlane.f32.xlu0 %v821
      %v823 = vpop.xlane.xlu0 %822
      %v824 = vsel %vm760, %v804, 0.0
      %825 = vadd.xlane.f32.xlu0 %v824
      %v826 = vpop.xlane.xlu0 %825
      %v827 = vsel %vm760, %v806, 0.0
      %828 = vadd.xlane.f32.xlu0 %v827
      %v829 = vpop.xlane.xlu0 %828
      %v830 = vsel %vm760, %v808, 0.0
      %831 = vadd.xlane.f32.xlu0 %v830
      %v832 = vpop.xlane.xlu0 %831
      %v833 = vrcp.pop %v811
      %v834 = vrcp.pop %v814
      %v835 = vrcp.pop %v817
      %v836 = vrcp.pop %v820
      %v837 = vrcp.pop %v823
      %v838 = vrcp.pop %v826
      %v839 = vrcp.pop %v829
      %v840 = vrcp.pop %v832
      %v841 = vmul.f32 %v794, %v833
      %v842 = vmul.f32 %v796, %v834
      %v843 = vmul.f32 %v798, %v835
      %v844 = vmul.f32 %v800, %v836
      %v845 = vmul.f32 %v802, %v837
      %v846 = vmul.f32 %v804, %v838
      %v847 = vmul.f32 %v806, %v839
      %v848 = vmul.f32 %v808, %v840
      %849 = vst.msk [vmem:[%s253] sm:$0xff] %vm760, %v841
      %850 = vst.msk [vmem:[%s253 + $0x8] sm:$0xff] %vm760, %v842
      %851 = vst.msk [vmem:[%s253 + $0x10] sm:$0xff] %vm760, %v843
      %852 = vst.msk [vmem:[%s253 + $0x18] sm:$0xff] %vm760, %v844
      %853 = vst.msk [vmem:[%s253 + $0x20] sm:$0xff] %vm760, %v845
      %854 = vst.msk [vmem:[%s253 + $0x28] sm:$0xff] %vm760, %v846
      %855 = vst.msk [vmem:[%s253 + $0x30] sm:$0xff] %vm760, %v847
      %856 = vst.msk [vmem:[%s253 + $0x38] sm:$0xff] %vm760, %v848
      %s857 = smul.u32 8, %s17
      %p858 = scmp.lt.s32.totalorder %s857, 15
      %s859 = scalar_select %p858, %s857, 15
      %s860 = smul.addr %s859, 8
      %s861 = scalar_lea.vmem %s6, %s860
      // Predicated region
      $region45: #{tpu_custom_call.1} parent=43 // pred_check
        %p862 = pneg %p166
      $region46: #{tpu_custom_call.1} parent=43 // pred_check_branch
        %864 = sbr.rel (%p862) target = $region48
      $region47: #{tpu_custom_call.1} parent=43 // pred_region
        %s865 = smul.u32 8, %s17
      $region48: #{tpu_custom_call.1} parent=43 // pred_fallthru
        _
    $region44: #{tpu_custom_call.1} parent=5 // pred_fallthru
      _
    %p866 = scmp.le.s32.totalorder 2, %s12
    // Predicated region
    $region49: #{tpu_custom_call.1} parent=5 // pred_check
      %p867 = pneg %p866
    $region50: #{tpu_custom_call.1} parent=5 // pred_check_branch
      %869 = sbr.rel (%p867) target = $region52
    $region51: #{tpu_custom_call.1} parent=5 // pred_region
      %s870 = ssub.s32 %s12, 2
      // Predicated region
      $region53: #{tpu_custom_call.1} parent=51 // pred_check
        %p871 = pneg %p172
      $region54: #{tpu_custom_call.1} parent=51 // pred_check_branch
        %873 = sbr.rel (%p871) target = $region56
      $region55: #{tpu_custom_call.1} parent=51 // pred_region
        %s874 = smul.u32 8, %s18
        %p875 = scmp.lt.s32.totalorder %s874, 15
        %s876 = scalar_select %p875, %s874, 15
        %s877 = smul.addr %s876, 8
        %s878 = scalar_lea.vmem %s6, %s877
      $region56: #{tpu_custom_call.1} parent=51 // pred_fallthru
        _
    $region52: #{tpu_custom_call.1} parent=5 // pred_fallthru
      _
  $region6: #{tpu_custom_call.1} parent=0 // loop_footer
    %s16 = sadd.s32 1, %s12
  $region7: #{tpu_custom_call.1} parent=0 // loop_footer_branch
    %11 = sbr.rel target = $region3
  $region8: #{tpu_custom_call.1} parent=0 // loop_exit
    _

</llo_original>
